<compile_context>
chip_gen: v6e
topology: v6e:2x2x1
jax: 0.10.0
libtpu: 0.0.40
codegen_flags: <defaults>
</compile_context>

<pallas_src>
import functools

import jax
import jax.numpy as jnp
from jax import lax
from jax.experimental import pallas as pl
from jax.experimental.pallas import tpu as pltpu


def _triplet_kernel(a_ref, p_ref, n_ref, loss_ref, *, margin, valid_rows,
                    block_rows):
    a = a_ref[...]
    p = p_ref[...]
    n = n_ref[...]
    if a.dtype != jnp.float32:
        a = a.astype(jnp.float32)
        p = p.astype(jnp.float32)
        n = n.astype(jnp.float32)

    # Fused form of dp - dn:
    #   |a-p|^2 - |a-n|^2 = sum(((a-p) - (a-n)) * ((a-p) + (a-n)))
    #                     = sum((n - p) * ((a - p) + (a - n)))
    d = (n - p) * ((a - p) + (a - n))                    # (TB, D)
    dp_minus_dn = jnp.sum(d, axis=1, keepdims=True)      # (TB, 1)

    losses = jnp.maximum(dp_minus_dn + jnp.float32(margin), 0.0)

    # Mask rows past the true batch size (only emitted when the last tile is
    # partial; costs one iota + compare + select per tile).
    if valid_rows % block_rows != 0:
        row = pl.program_id(0) * block_rows + lax.broadcasted_iota(
            jnp.int32, losses.shape, 0)
        losses = jnp.where(row < valid_rows, losses, 0.0)

    loss_ref[...] = losses.astype(loss_ref.dtype)


def triplet_loss(anchor, positive, negative, *, margin, size_average=True,
                 block_rows=None):
    """Pallas TripletLoss forward. anchor/positive/negative: (B, D)."""
    B, D = anchor.shape
    assert positive.shape == (B, D) and negative.shape == (B, D)

    itemsize = jnp.dtype(anchor.dtype).itemsize

    if block_rows is None:
        # 3 inputs x 2 pipeline buffers x TB x D x itemsize  <=  ~12 MiB
        # (safe under v5e's 16 MiB default scoped VMEM and v7x's 64 MiB
        #  physical VMEM, with headroom for the output and scheduler slack).
        input_budget = 12 * 1024 * 1024
        tb_cap = max(8, input_budget // (6 * D * itemsize))
        tb = min(B, 1024, tb_cap)
    else:
        tb = min(block_rows, B)

    if tb < B:
        # Tiled case: keep the sublane dim a multiple of 8.
        tb = max(8, (tb // 8) * 8)
    # (tb == B covers the full array dim, so any B is fine untiled.)

    num_tiles = pl.cdiv(B, tb)

    kernel = functools.partial(
        _triplet_kernel, margin=float(margin), valid_rows=B, block_rows=tb)

    losses = pl.pallas_call(
        kernel,
        out_shape=jax.ShapeDtypeStruct((B, 1), jnp.float32),
        grid=(num_tiles,),
        in_specs=[
            pl.BlockSpec((tb, D), lambda i: (i, 0)),
            pl.BlockSpec((tb, D), lambda i: (i, 0)),
            pl.BlockSpec((tb, D), lambda i: (i, 0)),
        ],
        out_specs=pl.BlockSpec((tb, 1), lambda i: (i, 0)),
        compiler_params=pltpu.CompilerParams(
            dimension_semantics=("parallel",),
            vmem_limit_bytes=32 * 1024 * 1024,
        ),
    )(anchor, positive, negative)

    losses = losses[:, 0]  # (B,)
    return jnp.mean(losses) if size_average else jnp.sum(losses)


def _reference(anchor, positive, negative, margin, size_average=True):
    dp = jnp.sum((anchor - positive) ** 2, axis=1)
    dn = jnp.sum((anchor - negative) ** 2, axis=1)
    losses = jnp.maximum(dp - dn + margin, 0.0)
    return jnp.mean(losses) if size_average else jnp.sum(losses)


if __name__ == "__main__":
    key = jax.random.PRNGKey(0)
    margin = 1.0

    # --- Test 1: small shape consistent with (batch, embedding_dim). ---
    k_a, k_p, k_n, key = jax.random.split(key, 4)
    B, D = 8, 32
    anchor = jax.random.normal(k_a, (B, D), dtype=jnp.float32)
    positive = jax.random.normal(k_p, (B, D), dtype=jnp.float32)
    negative = jax.random.normal(k_n, (B, D), dtype=jnp.float32)

    out = jax.block_until_ready(
        triplet_loss(anchor, positive, negative, margin=margin,
                     size_average=True))
    ref = _reference(anchor, positive, negative, margin, size_average=True)
    assert jnp.allclose(out, ref, rtol=1e-5, atol=1e-5), (out, ref)

    out_sum = jax.block_until_ready(
        triplet_loss(anchor, positive, negative, margin=margin,
                     size_average=False))
    ref_sum = _reference(anchor, positive, negative, margin,
                         size_average=False)
    assert jnp.allclose(out_sum, ref_sum, rtol=1e-5, atol=1e-5), (out_sum, ref_sum)

    # --- Test 2: tiled path with a partial last tile (B=20, TB=8) to
    #             exercise the multi-step grid + in-kernel row masking. ---
    k_a, k_p, k_n, key = jax.random.split(key, 4)
    B2, D2 = 20, 32
    anchor2 = jax.random.normal(k_a, (B2, D2), dtype=jnp.float32)
    positive2 = jax.random.normal(k_p, (B2, D2), dtype=jnp.float32)
    negative2 = jax.random.normal(k_n, (B2, D2), dtype=jnp.float32)

    out2 = jax.block_until_ready(
        triplet_loss(anchor2, positive2, negative2, margin=margin,
                     size_average=True, block_rows=8))
    ref2 = _reference(anchor2, positive2, negative2, margin,
                      size_average=True)
    assert jnp.allclose(out2, ref2, rtol=1e-5, atol=1e-5), (out2, ref2)

    out2_sum = jax.block_until_ready(
        triplet_loss(anchor2, positive2, negative2, margin=margin,
                     size_average=False, block_rows=8))
    ref2_sum = _reference(anchor2, positive2, negative2, margin,
                          size_average=False)
    assert jnp.allclose(out2_sum, ref2_sum, rtol=1e-5, atol=1e-5), (out2_sum,
                                                                    ref2_sum)

    print("KERNEL_OK")
</pallas_src>

<mosaic_0001>
module attributes {stable_mosaic.version = 11 : i64} {
  func.func @_triplet_kernel(%arg0: i32, %arg1: memref<8x32xf32, #tpu.memory_space<vmem>>, %arg2: memref<8x32xf32, #tpu.memory_space<vmem>>, %arg3: memref<8x32xf32, #tpu.memory_space<vmem>>, %arg4: memref<8x1xf32, #tpu.memory_space<vmem>>) attributes {dimension_semantics = [#tpu.dimension_semantics<parallel>], iteration_bounds = array<i64: 1>, scalar_prefetch = 0 : i64, scratch_operands = 0 : i64, tpu.core_type = #tpu.core_type<tc>, window_params = [{transform_indices = @transform_0, window_bounds = array<i64: 8, 32>}, {transform_indices = @transform_1, window_bounds = array<i64: 8, 32>}, {transform_indices = @transform_2, window_bounds = array<i64: 8, 32>}, {transform_indices = @transform_3, window_bounds = array<i64: 8, 1>}]} {
    %c0 = arith.constant 0 : index
    %c0_0 = arith.constant 0 : index
    %0 = vector.load %arg1[%c0, %c0_0] : memref<8x32xf32, #tpu.memory_space<vmem>>, vector<8x32xf32>
    %c0_1 = arith.constant 0 : index
    %c0_2 = arith.constant 0 : index
    %1 = vector.load %arg2[%c0_1, %c0_2] : memref<8x32xf32, #tpu.memory_space<vmem>>, vector<8x32xf32>
    %c0_3 = arith.constant 0 : index
    %c0_4 = arith.constant 0 : index
    %2 = vector.load %arg3[%c0_3, %c0_4] : memref<8x32xf32, #tpu.memory_space<vmem>>, vector<8x32xf32>
    %3 = arith.subf %2, %1 : vector<8x32xf32>
    %4 = arith.subf %0, %1 : vector<8x32xf32>
    %5 = arith.subf %0, %2 : vector<8x32xf32>
    %6 = arith.addf %4, %5 : vector<8x32xf32>
    %7 = arith.mulf %3, %6 : vector<8x32xf32>
    %cst = arith.constant dense<0.000000e+00> : vector<8xf32>
    %8 = vector.multi_reduction <add>, %7, %cst [1] : vector<8x32xf32> to vector<8xf32>
    %9 = vector.shape_cast %8 : vector<8xf32> to vector<8x1xf32>
    %cst_5 = arith.constant 1.000000e+00 : f32
    %10 = vector.broadcast %cst_5 : f32 to vector<8x1xf32>
    %11 = arith.addf %9, %10 : vector<8x1xf32>
    %cst_6 = arith.constant 0.000000e+00 : f32
    %12 = vector.broadcast %cst_6 : f32 to vector<8x1xf32>
    %13 = arith.maximumf %11, %12 : vector<8x1xf32>
    %c0_7 = arith.constant 0 : index
    %c0_8 = arith.constant 0 : index
    %14 = vector.load %arg4[%c0_7, %c0_8] : memref<8x1xf32, #tpu.memory_space<vmem>>, vector<8x1xf32>
    tpu.vector_store %arg4[%c0_7, %c0_8], %13 {strides = array<i32>} : memref<8x1xf32, #tpu.memory_space<vmem>>, vector<8x1xf32>,
    return
  }
  func.func @transform_0(%arg0: i32) -> (i32, i32) {
    %c0_i32 = arith.constant 0 : i32
    %c0_i32_0 = arith.constant 0 : i32
    return %arg0, %c0_i32 : i32, i32
  }
  func.func @transform_1(%arg0: i32) -> (i32, i32) {
    %c0_i32 = arith.constant 0 : i32
    %c0_i32_0 = arith.constant 0 : i32
    return %arg0, %c0_i32 : i32, i32
  }
  func.func @transform_2(%arg0: i32) -> (i32, i32) {
    %c0_i32 = arith.constant 0 : i32
    %c0_i32_0 = arith.constant 0 : i32
    return %arg0, %c0_i32 : i32, i32
  }
  func.func @transform_3(%arg0: i32) -> (i32, i32) {
    %c0_i32 = arith.constant 0 : i32
    %c0_i32_0 = arith.constant 0 : i32
    return %arg0, %c0_i32 : i32, i32
  }
}

</mosaic_0001>

<llo_original>
// kernel: tpu_custom_call.1
$region0: #{tpu_custom_call.1}
  #allocation0 [shape = 'u32[]', space=smem, size = 0x4, offset = 0x4, fixed_abs, tag = 'smem constant byte address 0x4 - core index']
  #allocation1 [shape = 'u32[144,128]{1,0:T(1,128)}', space=vmem, size = 0x12000, scoped, tag = 'internal scratch']
  %s0 = inlined_call_operand.hbm [shape: f32[8,32], index: 0, kind: input, shape index: {}]
  %s1 = inlined_call_operand.hbm [shape: f32[8,32], index: 1, kind: input, shape index: {}]
  %s2 = inlined_call_operand.hbm [shape: f32[8,32], index: 2, kind: input, shape index: {}]
  %s3 = inlined_call_operand.vmem [shape: f32[8,1], index: 3, kind: output, shape index: {}]
  %s4 = sld [smem:[#allocation0]]
  $region34: #{tpu_custom_call.1} parent=0
    _
  %s6 = ssub.s32 1, %s4
  %s7 = scalar_select 0, %s6, %s4
  $region1: #{tpu_custom_call.1} parent=0
    #allocation2 [shape = 'u8[4096]{0}', space=vmem, size = 0x1000, scoped, tag = 'input window, operand 0, single buffered']
    #allocation3 [shape = 's32[1]{0}', space=sflag, size = 0x4, scoped, tag = 'scoped memory for tpu_custom_call.1']
    #allocation4 [shape = 'u8[4096]{0}', space=vmem, size = 0x1000, scoped, tag = 'input window, operand 1, single buffered']
    #allocation5 [shape = 's32[1]{0}', space=sflag, size = 0x4, scoped, tag = 'scoped memory for tpu_custom_call.1']
    #allocation6 [shape = 'u8[4096]{0}', space=vmem, size = 0x1000, scoped, tag = 'input window, operand 2, single buffered']
    %8 = vsyncpa [#allocation3], 0
    %9 = vsyncpa [#allocation5], 0
    // Predicated region
    $region2: #{tpu_custom_call.1} parent=1 // pred_check
      _
    $region3: #{tpu_custom_call.1} parent=1 // pred_check_branch
      %11 = sbr.rel (0) target = $region5
    $region4: #{tpu_custom_call.1} parent=1 // pred_region
      %s13 = ssub.s32 128, 128
      %14 = vsyncadd [#allocation3], %s13
      %s16 = sshll.u32 [#allocation2], 4
      %s17 = int_to_ptr.vmem [resolvable:$true] %s16
      %19 = dma.hbm_to_vmem [thread:$0]  %s0, 128, %s17, [#allocation3]
    $region5: #{tpu_custom_call.1} parent=1 // pred_fallthru
      _
    // Predicated region
    $region6: #{tpu_custom_call.1} parent=1 // pred_check
      _
    $region7: #{tpu_custom_call.1} parent=1 // pred_check_branch
      %21 = sbr.rel (0) target = $region9
    $region8: #{tpu_custom_call.1} parent=1 // pred_region
      %s23 = ssub.s32 128, 128
      %24 = vsyncadd [#allocation5], %s23
      %s26 = sshll.u32 [#allocation4], 4
      %s27 = int_to_ptr.vmem [resolvable:$true] %s26
      %29 = dma.hbm_to_vmem [thread:$0]  %s1, 128, %s27, [#allocation5]
    $region9: #{tpu_custom_call.1} parent=1 // pred_fallthru
      _
    // Predicated region
    $region10: #{tpu_custom_call.1} parent=1 // pred_check
      _
    $region11: #{tpu_custom_call.1} parent=1 // pred_check_branch
      %31 = sbr.rel (0) target = $region13
    $region12: #{tpu_custom_call.1} parent=1 // pred_region
      %s33 = ssub.s32 128, 128
      %34 = vsyncadd [#allocation5], %s33
      %s36 = sshll.u32 [#allocation6], 4
      %s37 = int_to_ptr.vmem [resolvable:$true] %s36
      %39 = dma.hbm_to_vmem [thread:$0]  %s2, 128, %s37, [#allocation5]
    $region13: #{tpu_custom_call.1} parent=1 // pred_fallthru
      _
    // Predicated region
    $region14: #{tpu_custom_call.1} parent=1 // pred_check
      _
    $region15: #{tpu_custom_call.1} parent=1 // pred_check_branch
      %41 = sbr.rel (0) target = $region17
    $region16: #{tpu_custom_call.1} parent=1 // pred_region
      %42 = dma.done [#allocation3], 128
    $region17: #{tpu_custom_call.1} parent=1 // pred_fallthru
      _
    // Predicated region
    $region18: #{tpu_custom_call.1} parent=1 // pred_check
      _
    $region19: #{tpu_custom_call.1} parent=1 // pred_check_branch
      %44 = sbr.rel (0) target = $region21
    $region20: #{tpu_custom_call.1} parent=1 // pred_region
      %45 = dma.done [#allocation5], 128
    $region21: #{tpu_custom_call.1} parent=1 // pred_fallthru
      _
    // Predicated region
    $region22: #{tpu_custom_call.1} parent=1 // pred_check
      _
    $region23: #{tpu_custom_call.1} parent=1 // pred_check_branch
      %47 = sbr.rel (0) target = $region25
    $region24: #{tpu_custom_call.1} parent=1 // pred_region
      %48 = dma.done [#allocation5], 128
    $region25: #{tpu_custom_call.1} parent=1 // pred_fallthru
      _
    %v49 = vld [vmem:[#allocation2] sm:$0xff]
    %v50 = vld [vmem:[#allocation4] sm:$0xff]
    %v51 = vld [vmem:[#allocation6] sm:$0xff]
    %v52 = vsub.f32 %v51, %v50
    %v53 = vsub.f32 %v49, %v50
    %v54 = vsub.f32 %v49, %v51
    %v55 = vadd.f32 %v53, %v54
    %v56 = vmul.f32 %v52, %v55
    %vm57 = vcmask 261120
    %v58 = vsel %vm57, %v56, 0.0
    %59 = vadd.xlane.f32.xlu0 %v58
    %v60 = vpop.xlane.xlu0 %59
    %v61 = vadd.f32 %v60, 1.0
    %v62 = vmax.f32 %v61, 0.0
    %vm63 = vcmask 7168
    %64 = vst.msk [vmem:[%s3] sm:$0xff] %vm63, %v62
    // Predicated region
    $region26: #{tpu_custom_call.1} parent=1 // pred_check
      _
    $region27: #{tpu_custom_call.1} parent=1 // pred_check_branch
      %66 = sbr.rel (0) target = $region29
    $region28: #{tpu_custom_call.1} parent=1 // pred_region
      _
    $region29: #{tpu_custom_call.1} parent=1 // pred_fallthru
      _
    // Predicated region
    $region30: #{tpu_custom_call.1} parent=1 // pred_check
      _
    $region31: #{tpu_custom_call.1} parent=1 // pred_check_branch
      %68 = sbr.rel (0) target = $region33
    $region32: #{tpu_custom_call.1} parent=1 // pred_region
      _
    $region33: #{tpu_custom_call.1} parent=1 // pred_fallthru
      _
    %69 = vsyncpa [#allocation3], 1
    %70 = vsyncpa [#allocation5], 1

</llo_original>
